<compile_context>
chip_gen: v7x
topology: tpu7x:2x2x1
jax: 0.10.0
libtpu: 0.0.40
codegen_flags: <defaults>
</compile_context>

<pallas_src>
import jax
import jax.numpy as jnp
from jax import lax
from jax.experimental import pallas as pl
from jax.experimental.pallas import tpu as pltpu


def _round_up(x, m):
    return (x + m - 1) // m * m


# --------------------------------------------------------------------------------------
# Kernel: one invocation runs the whole sequence.
# --------------------------------------------------------------------------------------
def _make_encoder_gru_kernel(S, Hp):
    """S: real (unpadded) sequence length; Hp: lane-padded hidden size."""

    def kernel(x_ref,       # (Sp, Hp)   gathered embedding rows (param dtype)
               h0_ref,      # (1, Hp)    initial hidden, f32, zero-padded lanes
               wih_ref,     # (Hp, 3Hp)  packed W_ih^T   (param dtype)
               whh_ref,     # (Hp, 3Hp)  packed W_hh^T   (recurrent dtype, f32 default)
               bih_ref,     # (1, 3Hp)   packed b_ih     (f32)
               bhh_ref,     # (1, 3Hp)   packed b_hh     (f32)
               out_ref,     # (Sp, Hp)   per-step outputs (== hidden states)
               gi_buf):     # VMEM scratch (Sp, 3Hp) f32: hoisted input projection
        Sp = out_ref.shape[0]

        # ---- Phase 1: hoisted input projection, one batched MXU matmul (M = Sp). ----
        gi_buf[...] = jnp.dot(x_ref[...], wih_ref[...],
                              preferred_element_type=jnp.float32) + bih_ref[...]

        if Sp > S:
            # Pad rows are never read back, but keep the writeback deterministic.
            out_ref[...] = jnp.zeros_like(out_ref)

        # Hoist loop-invariant loads / broadcasts out of the recurrence.
        whh = whh_ref[...]
        bhh = bhh_ref[...]
        cdt_hh = whh.dtype

        # ---- Phase 2: recurrence. h is carried as a loop value (vregs), not re-read
        # from VMEM; only the tiny (1,Hp)x(Hp,3Hp) recurrent matvec remains serial. ----
        def step(s, h):                      # h: (1, Hp) f32
            gi = gi_buf[pl.ds(s, 1), :]      # (1, 3Hp) f32, precomputed
            gh = jnp.dot(h.astype(cdt_hh), whh,
                         preferred_element_type=jnp.float32) + bhh

            i_r, i_z, i_n = gi[:, 0:Hp], gi[:, Hp:2 * Hp], gi[:, 2 * Hp:3 * Hp]
            h_r, h_z, h_n = gh[:, 0:Hp], gh[:, Hp:2 * Hp], gh[:, 2 * Hp:3 * Hp]

            r = jax.nn.sigmoid(i_r + h_r)
            z = jax.nn.sigmoid(i_z + h_z)
            n = jnp.tanh(i_n + r * h_n)
            h_new = (1.0 - z) * n + z * h    # pad lanes stay 0 (h0/weights zero-padded)

            out_ref[pl.ds(s, 1), :] = h_new.astype(out_ref.dtype)
            return h_new

        lax.fori_loop(0, S, step, h0_ref[...].astype(jnp.float32),
                      unroll=(S <= 32))

    return kernel


# --------------------------------------------------------------------------------------
# One-time parameter packing (transpose / pad / cast happen here, NOT per forward call)
# --------------------------------------------------------------------------------------
def prepare_params(embedding, w_ih, w_hh, b_ih, b_hh,
                   param_dtype=jnp.bfloat16, recurrent_dtype=jnp.float32):
    """embedding: (V,H); w_ih/w_hh: (3H,H) PyTorch layout; b_ih/b_hh: (3H,).

    param_dtype     -> embedding + W_ih (feeds the hoisted, non-recurrent matmul)
    recurrent_dtype -> W_hh (kept f32 by default so no rounding enters the recurrence)
    """
    V, H = embedding.shape
    Hp = _round_up(H, 128)

    emb_p = jnp.zeros((V, Hp), param_dtype).at[:, :H].set(embedding.astype(param_dtype))

    def pack_w(w, dt):
        wp = jnp.zeros((Hp, 3 * Hp), dt)
        for g in range(3):
            wp = wp.at[:H, g * Hp:g * Hp + H].set(
                w[g * H:(g + 1) * H, :].T.astype(dt))
        return wp

    def pack_b(b):
        bp = jnp.zeros((1, 3 * Hp), jnp.float32)
        for g in range(3):
            bp = bp.at[0, g * Hp:g * Hp + H].set(b[g * H:(g + 1) * H].astype(jnp.float32))
        return bp

    return {
        "emb": emb_p,
        "wih": pack_w(w_ih, param_dtype),
        "whh": pack_w(w_hh, recurrent_dtype),
        "bih": pack_b(b_ih),
        "bhh": pack_b(b_hh),
        "H": H,
        "Hp": Hp,
    }


# --------------------------------------------------------------------------------------
# Forward wrappers
# --------------------------------------------------------------------------------------
def encoder_forward_seq(token_ids, hidden, params):
    """Run a whole token sequence through the GRU in a single pallas_call.

    token_ids: (S,) int32
    hidden   : (1, 1, H) f32 initial hidden
    returns  : outputs (S, 1, H), final hidden (1, 1, H)
    """
    H, Hp = params["H"], params["Hp"]
    S = int(token_ids.shape[0])
    Sp = _round_up(max(S, 1), 8)               # sublane-pad the sequence axis

    emb = params["emb"]
    # One-time gather outside the recurrence (feeds the hoisted input projection).
    x = jnp.take(emb, token_ids.astype(jnp.int32), axis=0)         # (S, Hp)
    x = jnp.zeros((Sp, Hp), emb.dtype).at[:S].set(x)

    h0 = jnp.zeros((1, Hp), jnp.float32).at[:, :H].set(
        hidden.reshape(1, H).astype(jnp.float32))

    kernel = _make_encoder_gru_kernel(S, Hp)

    out = pl.pallas_call(
        kernel,
        out_shape=jax.ShapeDtypeStruct((Sp, Hp), jnp.float32),
        grid_spec=pltpu.PrefetchScalarGridSpec(
            num_scalar_prefetch=0,
            grid=(1,),                          # time loop lives inside the kernel
            in_specs=[
                pl.BlockSpec((Sp, Hp), lambda i: (0, 0)),
                pl.BlockSpec((1, Hp), lambda i: (0, 0)),
                pl.BlockSpec((Hp, 3 * Hp), lambda i: (0, 0)),
                pl.BlockSpec((Hp, 3 * Hp), lambda i: (0, 0)),
                pl.BlockSpec((1, 3 * Hp), lambda i: (0, 0)),
                pl.BlockSpec((1, 3 * Hp), lambda i: (0, 0)),
            ],
            out_specs=pl.BlockSpec((Sp, Hp), lambda i: (0, 0)),
            scratch_shapes=[pltpu.VMEM((Sp, 3 * Hp), jnp.float32)],
        ),
        compiler_params=pltpu.CompilerParams(
            dimension_semantics=("arbitrary",)),
        # NOTE: for large H (e.g. Hp>=1024) set vmem_limit_bytes and keep weights bf16
        # so both weight tiles fit v7x's 64 MiB / v5e's 16 MiB-scoped VMEM comfortably.
    )(x, h0, params["wih"], params["whh"], params["bih"], params["bhh"])

    outputs = out[:S, :H]                          # strip lane/sublane padding
    hidden_new = outputs[S - 1].reshape(1, 1, H)   # GRU output == new hidden
    return outputs.reshape(S, 1, H), hidden_new


def encoder_forward(token_id, hidden, params):
    """Mirror of Encoder.forward(input, hidden): single token, batch 1."""
    out, hid = encoder_forward_seq(token_id.reshape(1), hidden, params)
    return out.reshape(1, 1, -1), hid


# TODO(synk): for multi-stream decode, stack streams on the matmul M dimension
# ((B, Hp) @ (Hp, 3Hp)) and shard a leading "parallel" batch axis across v7x's two
# TensorCores; this single-stream kernel leaves one TC idle on v7x.


# --------------------------------------------------------------------------------------
# Pure-JAX reference (torch.nn.GRU semantics)
# --------------------------------------------------------------------------------------
def _reference_forward_seq(token_ids, hidden, embedding, w_ih, w_hh, b_ih, b_hh):
    H = embedding.shape[1]
    h = hidden.reshape(1, H)
    outs = []
    for t in list(token_ids):
        x = embedding[t].reshape(1, H)
        gi = x @ w_ih.T + b_ih
        gh = h @ w_hh.T + b_hh
        i_r, i_z, i_n = gi[:, :H], gi[:, H:2 * H], gi[:, 2 * H:]
        h_r, h_z, h_n = gh[:, :H], gh[:, H:2 * H], gh[:, 2 * H:]
        r = jax.nn.sigmoid(i_r + h_r)
        z = jax.nn.sigmoid(i_z + h_z)
        n = jnp.tanh(i_n + r * h_n)
        h = (1.0 - z) * n + z * h
        outs.append(h)
    return jnp.stack(outs).reshape(len(outs), 1, H), h.reshape(1, 1, H)


# --------------------------------------------------------------------------------------
# Demo / self-test
# --------------------------------------------------------------------------------------
if __name__ == "__main__":
    input_size = 16       # vocab size
    hidden_size = 32      # H
    seq_len = 8

    key = jax.random.PRNGKey(0)
    k_emb, k_wih, k_whh, k_bih, k_bhh, k_tok = jax.random.split(key, 6)

    embedding = jax.random.normal(k_emb, (input_size, hidden_size), jnp.float32) * 0.1
    w_ih = jax.random.normal(k_wih, (3 * hidden_size, hidden_size), jnp.float32) * 0.1
    w_hh = jax.random.normal(k_whh, (3 * hidden_size, hidden_size), jnp.float32) * 0.1
    b_ih = jax.random.normal(k_bih, (3 * hidden_size,), jnp.float32) * 0.1
    b_hh = jax.random.normal(k_bhh, (3 * hidden_size,), jnp.float32) * 0.1

    hidden0 = jnp.zeros((1, 1, hidden_size), dtype=jnp.float32)
    token_id = jnp.array([7], dtype=jnp.int32)
    token_seq = jax.random.randint(k_tok, (seq_len,), 0, input_size, jnp.int32)

    ref1, ref_h1 = _reference_forward_seq(token_id, hidden0, embedding,
                                          w_ih, w_hh, b_ih, b_hh)
    ref_s, ref_hs = _reference_forward_seq(token_seq, hidden0, embedding,
                                           w_ih, w_hh, b_ih, b_hh)

    # ---- f32 params: tight match vs reference --------------------------------------
    params_f32 = prepare_params(embedding, w_ih, w_hh, b_ih, b_hh,
                                param_dtype=jnp.float32,
                                recurrent_dtype=jnp.float32)

    out1, hid1 = encoder_forward(token_id, hidden0, params_f32)
    out1 = jax.block_until_ready(out1)
    assert out1.shape == (1, 1, hidden_size) and hid1.shape == (1, 1, hidden_size)
    assert jnp.allclose(out1, ref1.reshape(1, 1, hidden_size), atol=1e-4), \
        "single-step output mismatch"
    assert jnp.allclose(hid1, ref_h1, atol=1e-4), "single-step hidden mismatch"

    out_s, hid_s = encoder_forward_seq(token_seq, hidden0, params_f32)
    out_s = jax.block_until_ready(out_s)
    assert out_s.shape == (seq_len, 1, hidden_size)
    assert jnp.allclose(out_s, ref_s, atol=1e-4), "sequence output mismatch (f32)"
    assert jnp.allclose(hid_s, ref_hs, atol=1e-4), "sequence hidden mismatch (f32)"

    # ---- default params: bf16 emb/W_ih, f32 W_hh (recurrence stays clean) -----------
    params_def = prepare_params(embedding, w_ih, w_hh, b_ih, b_hh)
    out_b, hid_b = encoder_forward_seq(token_seq, hidden0, params_def)
    out_b = jax.block_until_ready(out_b)
    assert jnp.allclose(out_b, ref_s, atol=3e-2), "sequence output mismatch (bf16)"
    assert jnp.allclose(hid_b, ref_hs, atol=3e-2), "sequence hidden mismatch (bf16)"

    print("KERNEL_OK")
</pallas_src>

<mosaic_0001>
module attributes {stable_mosaic.version = 11 : i64} {
  func.func @kernel(%arg0: i32, %arg1: memref<8x128xf32, #tpu.memory_space<vmem>>, %arg2: memref<1x128xf32, #tpu.memory_space<vmem>>, %arg3: memref<128x384xf32, #tpu.memory_space<vmem>>, %arg4: memref<128x384xf32, #tpu.memory_space<vmem>>, %arg5: memref<1x384xf32, #tpu.memory_space<vmem>>, %arg6: memref<1x384xf32, #tpu.memory_space<vmem>>, %arg7: memref<8x128xf32, #tpu.memory_space<vmem>>, %arg8: memref<8x384xf32, #tpu.memory_space<vmem>>) attributes {dimension_semantics = [#tpu.dimension_semantics<arbitrary>], iteration_bounds = array<i64: 1>, scalar_prefetch = 0 : i64, scratch_operands = 1 : i64, tpu.core_type = #tpu.core_type<tc>, window_params = [{pipeline_mode = #tpu.pipeline_mode<synchronous>, transform_indices = @transform_0, window_bounds = array<i64: 8, 128>}, {pipeline_mode = #tpu.pipeline_mode<synchronous>, transform_indices = @transform_1, window_bounds = array<i64: 1, 128>}, {pipeline_mode = #tpu.pipeline_mode<synchronous>, transform_indices = @transform_2, window_bounds = array<i64: 128, 384>}, {pipeline_mode = #tpu.pipeline_mode<synchronous>, transform_indices = @transform_3, window_bounds = array<i64: 128, 384>}, {pipeline_mode = #tpu.pipeline_mode<synchronous>, transform_indices = @transform_4, window_bounds = array<i64: 1, 384>}, {pipeline_mode = #tpu.pipeline_mode<synchronous>, transform_indices = @transform_5, window_bounds = array<i64: 1, 384>}, {pipeline_mode = #tpu.pipeline_mode<synchronous>, transform_indices = @transform_6, window_bounds = array<i64: 8, 128>}]} {
    %c0 = arith.constant 0 : index
    %c0_0 = arith.constant 0 : index
    %0 = vector.load %arg1[%c0, %c0_0] : memref<8x128xf32, #tpu.memory_space<vmem>>, vector<8x128xf32>
    %c0_1 = arith.constant 0 : index
    %c0_2 = arith.constant 0 : index
    %1 = vector.load %arg3[%c0_1, %c0_2] : memref<128x384xf32, #tpu.memory_space<vmem>>, vector<128x384xf32>
    %cst = arith.constant dense<0.000000e+00> : vector<8x384xf32>
    %2 = tpu.matmul %0, %1, %cst {dimension_numbers = #tpu.dot_dimension_numbers<[1], [0], [0], [1], [0, 0, 1, 1], [], []>} : vector<8x128xf32>, vector<128x384xf32>, vector<8x384xf32> -> vector<8x384xf32>
    %c0_3 = arith.constant 0 : index
    %c0_4 = arith.constant 0 : index
    %3 = vector.load %arg5[%c0_3, %c0_4] : memref<1x384xf32, #tpu.memory_space<vmem>>, vector<1x384xf32>
    %4 = vector.broadcast %3 : vector<1x384xf32> to vector<8x384xf32>
    %5 = arith.addf %2, %4 : vector<8x384xf32>
    %c0_5 = arith.constant 0 : index
    %c0_6 = arith.constant 0 : index
    %6 = vector.load %arg8[%c0_5, %c0_6] : memref<8x384xf32, #tpu.memory_space<vmem>>, vector<8x384xf32>
    tpu.vector_store %arg8[%c0_5, %c0_6], %5 {strides = array<i32>} : memref<8x384xf32, #tpu.memory_space<vmem>>, vector<8x384xf32>,
    %cst_7 = arith.constant 0.000000e+00 : f32
    %7 = vector.broadcast %cst_7 : f32 to vector<8x128xf32>
    %c0_8 = arith.constant 0 : index
    %c0_9 = arith.constant 0 : index
    %8 = vector.load %arg7[%c0_8, %c0_9] : memref<8x128xf32, #tpu.memory_space<vmem>>, vector<8x128xf32>
    tpu.vector_store %arg7[%c0_8, %c0_9], %7 {strides = array<i32>} : memref<8x128xf32, #tpu.memory_space<vmem>>, vector<8x128xf32>,
    %c0_10 = arith.constant 0 : index
    %c0_11 = arith.constant 0 : index
    %9 = vector.load %arg4[%c0_10, %c0_11] : memref<128x384xf32, #tpu.memory_space<vmem>>, vector<128x384xf32>
    %c0_12 = arith.constant 0 : index
    %c0_13 = arith.constant 0 : index
    %10 = vector.load %arg6[%c0_12, %c0_13] : memref<1x384xf32, #tpu.memory_space<vmem>>, vector<1x384xf32>
    %c0_14 = arith.constant 0 : index
    %c0_15 = arith.constant 0 : index
    %11 = vector.load %arg2[%c0_14, %c0_15] : memref<1x128xf32, #tpu.memory_space<vmem>>, vector<1x128xf32>
    %c0_i32 = arith.constant 0 : i32
    %12 = arith.index_cast %c0_i32 : i32 to index
    %c0_16 = arith.constant 0 : index
    %13 = vector.load %arg8[%12, %c0_16] : memref<8x384xf32, #tpu.memory_space<vmem>>, vector<1x384xf32>
    %cst_17 = arith.constant dense<0.000000e+00> : vector<1x384xf32>
    %14 = tpu.matmul %11, %9, %cst_17 {dimension_numbers = #tpu.dot_dimension_numbers<[1], [0], [0], [1], [0, 0, 1, 1], [], []>} : vector<1x128xf32>, vector<128x384xf32>, vector<1x384xf32> -> vector<1x384xf32>
    %15 = arith.addf %14, %10 : vector<1x384xf32>
    %16 = vector.extract_strided_slice %13 {offsets = [0, 0], sizes = [1, 128], strides = [1, 1]} : vector<1x384xf32> to vector<1x128xf32>
    %17 = vector.extract_strided_slice %13 {offsets = [0, 128], sizes = [1, 128], strides = [1, 1]} : vector<1x384xf32> to vector<1x128xf32>
    %18 = vector.extract_strided_slice %13 {offsets = [0, 256], sizes = [1, 128], strides = [1, 1]} : vector<1x384xf32> to vector<1x128xf32>
    %19 = vector.extract_strided_slice %15 {offsets = [0, 0], sizes = [1, 128], strides = [1, 1]} : vector<1x384xf32> to vector<1x128xf32>
    %20 = vector.extract_strided_slice %15 {offsets = [0, 128], sizes = [1, 128], strides = [1, 1]} : vector<1x384xf32> to vector<1x128xf32>
    %21 = vector.extract_strided_slice %15 {offsets = [0, 256], sizes = [1, 128], strides = [1, 1]} : vector<1x384xf32> to vector<1x128xf32>
    %22 = arith.addf %16, %19 : vector<1x128xf32>
    %23 = arith.negf %22 : vector<1x128xf32>
    %24 = math.exp %23 : vector<1x128xf32>
    %cst_18 = arith.constant 1.000000e+00 : f32
    %25 = vector.broadcast %cst_18 : f32 to vector<1x128xf32>
    %26 = arith.addf %25, %24 : vector<1x128xf32>
    %27 = arith.divf %25, %26 : vector<1x128xf32>
    %28 = arith.addf %17, %20 : vector<1x128xf32>
    %29 = arith.negf %28 : vector<1x128xf32>
    %30 = math.exp %29 : vector<1x128xf32>
    %cst_19 = arith.constant 1.000000e+00 : f32
    %31 = vector.broadcast %cst_19 : f32 to vector<1x128xf32>
    %32 = arith.addf %31, %30 : vector<1x128xf32>
    %33 = arith.divf %31, %32 : vector<1x128xf32>
    %34 = arith.mulf %27, %21 : vector<1x128xf32>
    %35 = arith.addf %18, %34 : vector<1x128xf32>
    %36 = math.tanh %35 : vector<1x128xf32>
    %cst_20 = arith.constant 1.000000e+00 : f32
    %37 = vector.broadcast %cst_20 : f32 to vector<1x128xf32>
    %38 = arith.subf %37, %33 : vector<1x128xf32>
    %39 = arith.mulf %38, %36 : vector<1x128xf32>
    %40 = arith.mulf %33, %11 : vector<1x128xf32>
    %41 = arith.addf %39, %40 : vector<1x128xf32>
    %42 = arith.index_cast %c0_i32 : i32 to index
    %c0_21 = arith.constant 0 : index
    %43 = vector.load %arg7[%42, %c0_21] : memref<8x128xf32, #tpu.memory_space<vmem>>, vector<1x128xf32>
    tpu.vector_store %arg7[%42, %c0_21], %41 {strides = array<i32>} : memref<8x128xf32, #tpu.memory_space<vmem>>, vector<1x128xf32>,
    %c1_i32 = arith.constant 1 : i32
    return
  }
  func.func @transform_0(%arg0: i32) -> (i32, i32) {
    %c0_i32 = arith.constant 0 : i32
    %c0_i32_0 = arith.constant 0 : i32
    %c0_i32_1 = arith.constant 0 : i32
    return %c0_i32, %c0_i32_0 : i32, i32
  }
  func.func @transform_1(%arg0: i32) -> (i32, i32) {
    %c0_i32 = arith.constant 0 : i32
    %c0_i32_0 = arith.constant 0 : i32
    %c0_i32_1 = arith.constant 0 : i32
    return %c0_i32, %c0_i32_0 : i32, i32
  }
  func.func @transform_2(%arg0: i32) -> (i32, i32) {
    %c0_i32 = arith.constant 0 : i32
    %c0_i32_0 = arith.constant 0 : i32
    %c0_i32_1 = arith.constant 0 : i32
    return %c0_i32, %c0_i32_0 : i32, i32
  }
  func.func @transform_3(%arg0: i32) -> (i32, i32) {
    %c0_i32 = arith.constant 0 : i32
    %c0_i32_0 = arith.constant 0 : i32
    %c0_i32_1 = arith.constant 0 : i32
    return %c0_i32, %c0_i32_0 : i32, i32
  }
  func.func @transform_4(%arg0: i32) -> (i32, i32) {
    %c0_i32 = arith.constant 0 : i32
    %c0_i32_0 = arith.constant 0 : i32
    %c0_i32_1 = arith.constant 0 : i32
    return %c0_i32, %c0_i32_0 : i32, i32
  }
  func.func @transform_5(%arg0: i32) -> (i32, i32) {
    %c0_i32 = arith.constant 0 : i32
    %c0_i32_0 = arith.constant 0 : i32
    %c0_i32_1 = arith.constant 0 : i32
    return %c0_i32, %c0_i32_0 : i32, i32
  }
  func.func @transform_6(%arg0: i32) -> (i32, i32) {
    %c0_i32 = arith.constant 0 : i32
    %c0_i32_0 = arith.constant 0 : i32
    %c0_i32_1 = arith.constant 0 : i32
    return %c0_i32, %c0_i32_0 : i32, i32
  }
}

</mosaic_0001>

<llo_original>
// kernel: tpu_custom_call.1
$region0: #{tpu_custom_call.1}
  #allocation0 [shape = 'u32[]', space=smem, size = 0x4, offset = 0x4, fixed_abs, tag = 'smem constant byte address 0x4 - core index']
  #allocation1 [shape = 'u32[144,128]{1,0:T(1,128)}', space=vmem, size = 0x12000, scoped, tag = 'internal scratch']
  #allocation2 [shape = 'f32[8,384]{1,0:T(8,128)}', space=vmem, size = 0x3000, scoped, tag = 'scratch operand']
  %s0 = inlined_call_operand.hbm [shape: f32[8,128], index: 0, kind: input, shape index: {}]
  %s1 = inlined_call_operand.vmem [shape: f32[1,128], index: 1, kind: input, shape index: {}]
  %s2 = inlined_call_operand.hbm [shape: f32[128,384], index: 2, kind: input, shape index: {}]
  %s3 = inlined_call_operand.hbm [shape: f32[128,384], index: 3, kind: input, shape index: {}]
  %s4 = inlined_call_operand.vmem [shape: f32[1,384], index: 4, kind: input, shape index: {}]
  %s5 = inlined_call_operand.vmem [shape: f32[1,384], index: 5, kind: input, shape index: {}]
  %s6 = inlined_call_operand.hbm [shape: f32[8,128], index: 6, kind: output, shape index: {}]
  %s7 = sld [smem:[#allocation0]]
  $region46: #{tpu_custom_call.1} parent=0
    _
  %s9 = ssub.s32 1, %s7
  %s10 = scalar_select 0, %s9, %s7
  $region1: #{tpu_custom_call.1} parent=0
    #allocation3 [shape = 'u8[4096]{0}', space=vmem, size = 0x1000, scoped, tag = 'input window, operand 0, single buffered']
    #allocation4 [shape = 's32[1]{0}', space=sflag, size = 0x4, scoped, tag = 'scoped memory for tpu_custom_call.1']
    #allocation5 [shape = 's32[1]{0}', space=sflag, size = 0x4, scoped, tag = 'scoped memory for tpu_custom_call.1']
    #allocation6 [shape = 'u8[196608]{0}', space=vmem, size = 0x30000, scoped, tag = 'input window, operand 2, single buffered']
    #allocation7 [shape = 's32[1]{0}', space=sflag, size = 0x4, scoped, tag = 'scoped memory for tpu_custom_call.1']
    #allocation8 [shape = 'u8[196608]{0}', space=vmem, size = 0x30000, scoped, tag = 'input window, operand 3, single buffered']
    #allocation9 [shape = 'u8[4096]{0}', space=vmem, size = 0x1000, scoped, tag = 'output window, operand 0, single buffered']
    %11 = vsyncpa [#allocation4], 0
    %12 = vsyncpa [#allocation7], 0
    %13 = vsyncpa [#allocation5], 0
    // Predicated region
    $region2: #{tpu_custom_call.1} parent=1 // pred_check
      _
    $region3: #{tpu_custom_call.1} parent=1 // pred_check_branch
      %15 = sbr.rel (0) target = $region5
    $region4: #{tpu_custom_call.1} parent=1 // pred_region
      %s17 = ssub.s32 128, 128
      %18 = vsyncadd [#allocation4], %s17
      %s20 = sshll.u32 [#allocation3], 4
      %s21 = int_to_ptr.vmem [resolvable:$true] %s20
      %23 = dma.hbm_to_vmem [thread:$0]  %s0, 128, %s21, [#allocation4]
    $region5: #{tpu_custom_call.1} parent=1 // pred_fallthru
      _
    // Predicated region
    $region6: #{tpu_custom_call.1} parent=1 // pred_check
      _
    $region7: #{tpu_custom_call.1} parent=1 // pred_check_branch
      %25 = sbr.rel (0) target = $region9
    $region8: #{tpu_custom_call.1} parent=1 // pred_region
      _
    $region9: #{tpu_custom_call.1} parent=1 // pred_fallthru
      _
    // Predicated region
    $region10: #{tpu_custom_call.1} parent=1 // pred_check
      _
    $region11: #{tpu_custom_call.1} parent=1 // pred_check_branch
      %27 = sbr.rel (0) target = $region13
    $region12: #{tpu_custom_call.1} parent=1 // pred_region
      %s29 = ssub.s32 6144, 6144
      %30 = vsyncadd [#allocation7], %s29
      %s31 = sshll.u32 [#allocation6], 4
      %s32 = int_to_ptr.vmem [resolvable:$true] %s31
      %37 = dma.hbm_to_vmem [thread:$0]  %s2, 6144, %s32, [#allocation7], 384, 384, 24
    $region13: #{tpu_custom_call.1} parent=1 // pred_fallthru
      _
    // Predicated region
    $region14: #{tpu_custom_call.1} parent=1 // pred_check
      _
    $region15: #{tpu_custom_call.1} parent=1 // pred_check_branch
      %39 = sbr.rel (0) target = $region17
    $region16: #{tpu_custom_call.1} parent=1 // pred_region
      %s41 = ssub.s32 6144, 6144
      %42 = vsyncadd [#allocation7], %s41
      %s43 = sshll.u32 [#allocation8], 4
      %s44 = int_to_ptr.vmem [resolvable:$true] %s43
      %49 = dma.hbm_to_vmem [thread:$0]  %s3, 6144, %s44, [#allocation7], 384, 384, 24
    $region17: #{tpu_custom_call.1} parent=1 // pred_fallthru
      _
    // Predicated region
    $region18: #{tpu_custom_call.1} parent=1 // pred_check
      _
    $region19: #{tpu_custom_call.1} parent=1 // pred_check_branch
      %51 = sbr.rel (0) target = $region21
    $region20: #{tpu_custom_call.1} parent=1 // pred_region
      _
    $region21: #{tpu_custom_call.1} parent=1 // pred_fallthru
      _
    // Predicated region
    $region22: #{tpu_custom_call.1} parent=1 // pred_check
      _
    $region23: #{tpu_custom_call.1} parent=1 // pred_check_branch
      %53 = sbr.rel (0) target = $region25
    $region24: #{tpu_custom_call.1} parent=1 // pred_region
      _
    $region25: #{tpu_custom_call.1} parent=1 // pred_fallthru
      _
    // Predicated region
    $region26: #{tpu_custom_call.1} parent=1 // pred_check
      _
    $region27: #{tpu_custom_call.1} parent=1 // pred_check_branch
      %55 = sbr.rel (0) target = $region29
    $region28: #{tpu_custom_call.1} parent=1 // pred_region
      %56 = dma.done [#allocation4], 128
    $region29: #{tpu_custom_call.1} parent=1 // pred_fallthru
      _
    // Predicated region
    $region30: #{tpu_custom_call.1} parent=1 // pred_check
      _
    $region31: #{tpu_custom_call.1} parent=1 // pred_check_branch
      %58 = sbr.rel (0) target = $region33
    $region32: #{tpu_custom_call.1} parent=1 // pred_region
      %59 = dma.done [#allocation7], 6144
    $region33: #{tpu_custom_call.1} parent=1 // pred_fallthru
      _
    // Predicated region
    $region34: #{tpu_custom_call.1} parent=1 // pred_check
      _
    $region35: #{tpu_custom_call.1} parent=1 // pred_check_branch
      %61 = sbr.rel (0) target = $region37
    $region36: #{tpu_custom_call.1} parent=1 // pred_region
      %62 = dma.done [#allocation7], 6144
    $region37: #{tpu_custom_call.1} parent=1 // pred_fallthru
      _
    %v63 = vld [vmem:[#allocation3] sm:$0xff]
    %v64 = vld [vmem:[#allocation6] sm:$0xff]
    %v65 = vld [vmem:[#allocation6 + $0x8] sm:$0xff]
    %v66 = vld [vmem:[#allocation6 + $0x10] sm:$0xff]
    %v67 = vld [vmem:[#allocation6 + $0x18] sm:$0xff]
    %v68 = vld [vmem:[#allocation6 + $0x20] sm:$0xff]
    %v69 = vld [vmem:[#allocation6 + $0x28] sm:$0xff]
    %v70 = vld [vmem:[#allocation6 + $0x30] sm:$0xff]
    %v71 = vld [vmem:[#allocation6 + $0x38] sm:$0xff]
    %v72 = vld [vmem:[#allocation6 + $0x40] sm:$0xff]
    %v73 = vld [vmem:[#allocation6 + $0x48] sm:$0xff]
    %v74 = vld [vmem:[#allocation6 + $0x50] sm:$0xff]
    %v75 = vld [vmem:[#allocation6 + $0x58] sm:$0xff]
    %v76 = vld [vmem:[#allocation6 + $0x60] sm:$0xff]
    %v77 = vld [vmem:[#allocation6 + $0x68] sm:$0xff]
    %v78 = vld [vmem:[#allocation6 + $0x70] sm:$0xff]
    %v79 = vld [vmem:[#allocation6 + $0x78] sm:$0xff]
    %v80 = vld [vmem:[#allocation6 + $0x80] sm:$0xff]
    %v81 = vld [vmem:[#allocation6 + $0x88] sm:$0xff]
    %v82 = vld [vmem:[#allocation6 + $0x90] sm:$0xff]
    %v83 = vld [vmem:[#allocation6 + $0x98] sm:$0xff]
    %v84 = vld [vmem:[#allocation6 + $0xa0] sm:$0xff]
    %v85 = vld [vmem:[#allocation6 + $0xa8] sm:$0xff]
    %v86 = vld [vmem:[#allocation6 + $0xb0] sm:$0xff]
    %v87 = vld [vmem:[#allocation6 + $0xb8] sm:$0xff]
    %v88 = vld [vmem:[#allocation6 + $0xc0] sm:$0xff]
    %v89 = vld [vmem:[#allocation6 + $0xc8] sm:$0xff]
    %v90 = vld [vmem:[#allocation6 + $0xd0] sm:$0xff]
    %v91 = vld [vmem:[#allocation6 + $0xd8] sm:$0xff]
    %v92 = vld [vmem:[#allocation6 + $0xe0] sm:$0xff]
    %v93 = vld [vmem:[#allocation6 + $0xe8] sm:$0xff]
    %v94 = vld [vmem:[#allocation6 + $0xf0] sm:$0xff]
    %v95 = vld [vmem:[#allocation6 + $0xf8] sm:$0xff]
    %v96 = vld [vmem:[#allocation6 + $0x100] sm:$0xff]
    %v97 = vld [vmem:[#allocation6 + $0x108] sm:$0xff]
    %v98 = vld [vmem:[#allocation6 + $0x110] sm:$0xff]
    %v99 = vld [vmem:[#allocation6 + $0x118] sm:$0xff]
    %v100 = vld [vmem:[#allocation6 + $0x120] sm:$0xff]
    %v101 = vld [vmem:[#allocation6 + $0x128] sm:$0xff]
    %v102 = vld [vmem:[#allocation6 + $0x130] sm:$0xff]
    %v103 = vld [vmem:[#allocation6 + $0x138] sm:$0xff]
    %v104 = vld [vmem:[#allocation6 + $0x140] sm:$0xff]
    %v105 = vld [vmem:[#allocation6 + $0x148] sm:$0xff]
    %v106 = vld [vmem:[#allocation6 + $0x150] sm:$0xff]
    %v107 = vld [vmem:[#allocation6 + $0x158] sm:$0xff]
    %v108 = vld [vmem:[#allocation6 + $0x160] sm:$0xff]
    %v109 = vld [vmem:[#allocation6 + $0x168] sm:$0xff]
    %v110 = vld [vmem:[#allocation6 + $0x170] sm:$0xff]
    %v111 = vld [vmem:[#allocation6 + $0x178] sm:$0xff]
    %v112 = vld [vmem:[%s4] sm:$0x7]
    %v114 = vlaneseq
    %v115 = vshrl.u32 %v114, 7
    %v116 = vsub.s32 0, %v115
    %v117 = vrot.slane %v112, %v116
    %v118 = vlaneseq
    %v119 = vshrl.u32 %v118, 7
    %v120 = vsub.s32 1, %v119
    %v121 = vrot.slane %v112, %v120
    %v122 = vlaneseq
    %v123 = vshrl.u32 %v122, 7
    %v124 = vsub.s32 2, %v123
    %v125 = vrot.slane %v112, %v124
    %129 = vmatprep.subr.mxu0 %v65
    %130 = vmatpush1.msra.mxu0 %v64
    %131 = vmatprep.subr.mxu0 %v68
    %132 = vmatpush1.msra.mxu0 %v67
    %133 = vmatprep.subr.mxu0 %v71
    %134 = vmatpush1.msra.mxu0 %v70
    %135 = vmatprep.subr.mxu0 %v74
    %136 = vmatpush1.msra.mxu0 %v73
    %137 = vmatprep.subr.mxu0 %v77
    %138 = vmatpush1.msra.mxu0 %v76
    %139 = vmatprep.subr.mxu0 %v80
    %140 = vmatpush1.msra.mxu0 %v79
    %141 = vmatprep.subr.mxu0 %v83
    %142 = vmatpush1.msra.mxu0 %v82
    %143 = vmatprep.subr.mxu0 %v86
    %144 = vmatpush1.msra.mxu0 %v85
    %145 = vmatprep.subr.mxu0 %v89
    %146 = vmatpush1.msra.mxu0 %v88
    %147 = vmatprep.subr.mxu0 %v92
    %148 = vmatpush1.msra.mxu0 %v91
    %149 = vmatprep.subr.mxu0 %v95
    %150 = vmatpush1.msra.mxu0 %v94
    %151 = vmatprep.subr.mxu0 %v98
    %152 = vmatpush1.msra.mxu0 %v97
    %153 = vmatprep.subr.mxu0 %v101
    %154 = vmatpush1.msra.mxu0 %v100
    %155 = vmatprep.subr.mxu0 %v104
    %156 = vmatpush1.msra.mxu0 %v103
    %157 = vmatprep.subr.mxu0 %v107
    %158 = vmatpush1.msra.mxu0 %v106
    %159 = vmatprep.subr.mxu0 %v110
    %160 = vmatpush1.msra.mxu0 %v109
    %161 = vmatprep.subr.mxu0 0.0
    %162 = vmatpush1.msra.mxu0 0.0
    %163 = vmatprep.subr.mxu0 0.0
    %164 = vmatpush1.msra.mxu0 0.0
    %165 = vmatprep.subr.mxu0 0.0
    %166 = vmatpush1.msra.mxu0 0.0
    %167 = vmatprep.subr.mxu0 0.0
    %168 = vmatpush1.msra.mxu0 0.0
    %169 = vmatprep.subr.mxu0 0.0
    %170 = vmatpush1.msra.mxu0 0.0
    %171 = vmatprep.subr.mxu0 0.0
    %172 = vmatpush1.msra.mxu0 0.0
    %173 = vmatprep.subr.mxu0 0.0
    %174 = vmatpush1.msra.mxu0 0.0
    %175 = vmatprep.subr.mxu0 0.0
    %176 = vmatpush1.msra.mxu0 0.0
    %177 = vmatprep.subr.mxu0 0.0
    %178 = vmatpush1.msra.mxu0 0.0
    %179 = vmatprep.subr.mxu0 0.0
    %180 = vmatpush1.msra.mxu0 0.0
    %181 = vmatprep.subr.mxu0 0.0
    %182 = vmatpush1.msra.mxu0 0.0
    %183 = vmatprep.subr.mxu0 0.0
    %184 = vmatpush1.msra.mxu0 0.0
    %185 = vmatprep.subr.mxu0 0.0
    %186 = vmatpush1.msra.mxu0 0.0
    %187 = vmatprep.subr.mxu0 0.0
    %188 = vmatpush1.msra.mxu0 0.0
    %189 = vmatprep.subr.mxu0 0.0
    %190 = vmatpush1.msra.mxu0 0.0
    %191 = vmatprep.subr.mxu0 0.0
    %192 = vmatpush1.msra.mxu0 0.0
    %193 = vmatprep.mubr.f32.mxu0 0.0
    %194 = vmatmul.mubr.f32.gmra.mrb[0].mxu0 %v63
    %v195 = vpop.f32.mrb[0].mxu0
    %v196 = vadd.f32 %v117, %v195
    %v197 = vpop.f32.mrb[0].mxu0
    %v198 = vadd.f32 %v121, %v197
    %199 = vdwg.mxu0
    %200 = vmatprep.subr.mxu0 0.0
    %201 = vmatpush1.msra.mxu0 %v66
    %202 = vmatprep.subr.mxu0 0.0
    %203 = vmatpush1.msra.mxu0 %v69
    %204 = vmatprep.subr.mxu0 0.0
    %205 = vmatpush1.msra.mxu0 %v72
    %206 = vmatprep.subr.mxu0 0.0
    %207 = vmatpush1.msra.mxu0 %v75
    %208 = vmatprep.subr.mxu0 0.0
    %209 = vmatpush1.msra.mxu0 %v78
    %210 = vmatprep.subr.mxu0 0.0
    %211 = vmatpush1.msra.mxu0 %v81
    %212 = vmatprep.subr.mxu0 0.0
    %213 = vmatpush1.msra.mxu0 %v84
    %214 = vmatprep.subr.mxu0 0.0
    %215 = vmatpush1.msra.mxu0 %v87
    %216 = vmatprep.subr.mxu0 0.0
    %217 = vmatpush1.msra.mxu0 %v90
    %218 = vmatprep.subr.mxu0 0.0
    %219 = vmatpush1.msra.mxu0 %v93
    %220 = vmatprep.subr.mxu0 0.0
    %221 = vmatpush1.msra.mxu0 %v96
    %222 = vmatprep.subr.mxu0 0.0
    %223 = vmatpush1.msra.mxu0 %v99
    %224 = vmatprep.subr.mxu0 0.0
    %225 = vmatpush1.msra.mxu0 %v102
    %226 = vmatprep.subr.mxu0 0.0
    %227 = vmatpush1.msra.mxu0 %v105
    %228 = vmatprep.subr.mxu0 0.0
    %229 = vmatpush1.msra.mxu0 %v108
    %230 = vmatprep.subr.mxu0 0.0
    %231 = vmatpush1.msra.mxu0 %v111
    %232 = vmatprep.subr.mxu0 0.0
    %233 = vmatpush1.msra.mxu0 0.0
    %234 = vmatprep.subr.mxu0 0.0
    %235 = vmatpush1.msra.mxu0 0.0
    %236 = vmatprep.subr.mxu0 0.0
    %237 = vmatpush1.msra.mxu0 0.0
    %238 = vmatprep.subr.mxu0 0.0
    %239 = vmatpush1.msra.mxu0 0.0
    %240 = vmatprep.subr.mxu0 0.0
    %241 = vmatpush1.msra.mxu0 0.0
    %242 = vmatprep.subr.mxu0 0.0
    %243 = vmatpush1.msra.mxu0 0.0
    %244 = vmatprep.subr.mxu0 0.0
    %245 = vmatpush1.msra.mxu0 0.0
    %246 = vmatprep.subr.mxu0 0.0
    %247 = vmatpush1.msra.mxu0 0.0
    %248 = vmatprep.subr.mxu0 0.0
    %249 = vmatpush1.msra.mxu0 0.0
    %250 = vmatprep.subr.mxu0 0.0
    %251 = vmatpush1.msra.mxu0 0.0
    %252 = vmatprep.subr.mxu0 0.0
    %253 = vmatpush1.msra.mxu0 0.0
    %254 = vmatprep.subr.mxu0 0.0
    %255 = vmatpush1.msra.mxu0 0.0
    %256 = vmatprep.subr.mxu0 0.0
    %257 = vmatpush1.msra.mxu0 0.0
    %258 = vmatprep.subr.mxu0 0.0
    %259 = vmatpush1.msra.mxu0 0.0
    %260 = vmatprep.subr.mxu0 0.0
    %261 = vmatpush1.msra.mxu0 0.0
    %262 = vmatprep.subr.mxu0 0.0
    %263 = vmatpush1.msra.mxu0 0.0
    %264 = vmatprep.mubr.f32.mxu0 0.0
    %265 = vmatmul.mubr.f32.gmra.mrb[0].mxu0 %v63
    %v266 = vpop.f32.mrb[0].mxu0
    %v267 = vadd.f32 %v125, %v266
    %v268 = vpop.f32.mrb[0].mxu0
    %269 = vdwg.mxu0
    %270 = vst [vmem:[#allocation2] sm:$0xff] %v196
    %271 = vst [vmem:[#allocation2 + $0x8] sm:$0xff] %v198
    %272 = vst [vmem:[#allocation2 + $0x10] sm:$0xff] %v267
    %273 = vst [vmem:[#allocation9] sm:$0xff] 0.0
    %v274 = vld [vmem:[#allocation8] sm:$0xff]
    %v275 = vld [vmem:[#allocation8 + $0x8] sm:$0xff]
    %v276 = vld [vmem:[#allocation8 + $0x10] sm:$0xff]
    %v277 = vld [vmem:[#allocation8 + $0x18] sm:$0xff]
    %v278 = vld [vmem:[#allocation8 + $0x20] sm:$0xff]
    %v279 = vld [vmem:[#allocation8 + $0x28] sm:$0xff]
    %v280 = vld [vmem:[#allocation8 + $0x30] sm:$0xff]
    %v281 = vld [vmem:[#allocation8 + $0x38] sm:$0xff]
    %v282 = vld [vmem:[#allocation8 + $0x40] sm:$0xff]
    %v283 = vld [vmem:[#allocation8 + $0x48] sm:$0xff]
    %v284 = vld [vmem:[#allocation8 + $0x50] sm:$0xff]
    %v285 = vld [vmem:[#allocation8 + $0x58] sm:$0xff]
    %v286 = vld [vmem:[#allocation8 + $0x60] sm:$0xff]
    %v287 = vld [vmem:[#allocation8 + $0x68] sm:$0xff]
    %v288 = vld [vmem:[#allocation8 + $0x70] sm:$0xff]
    %v289 = vld [vmem:[#allocation8 + $0x78] sm:$0xff]
    %v290 = vld [vmem:[#allocation8 + $0x80] sm:$0xff]
    %v291 = vld [vmem:[#allocation8 + $0x88] sm:$0xff]
    %v292 = vld [vmem:[#allocation8 + $0x90] sm:$0xff]
    %v293 = vld [vmem:[#allocation8 + $0x98] sm:$0xff]
    %v294 = vld [vmem:[#allocation8 + $0xa0] sm:$0xff]
    %v295 = vld [vmem:[#allocation8 + $0xa8] sm:$0xff]
    %v296 = vld [vmem:[#allocation8 + $0xb0] sm:$0xff]
    %v297 = vld [vmem:[#allocation8 + $0xb8] sm:$0xff]
    %v298 = vld [vmem:[#allocation8 + $0xc0] sm:$0xff]
    %v299 = vld [vmem:[#allocation8 + $0xc8] sm:$0xff]
    %v300 = vld [vmem:[#allocation8 + $0xd0] sm:$0xff]
    %v301 = vld [vmem:[#allocation8 + $0xd8] sm:$0xff]
    %v302 = vld [vmem:[#allocation8 + $0xe0] sm:$0xff]
    %v303 = vld [vmem:[#allocation8 + $0xe8] sm:$0xff]
    %v304 = vld [vmem:[#allocation8 + $0xf0] sm:$0xff]
    %v305 = vld [vmem:[#allocation8 + $0xf8] sm:$0xff]
    %v306 = vld [vmem:[#allocation8 + $0x100] sm:$0xff]
    %v307 = vld [vmem:[#allocation8 + $0x108] sm:$0xff]
    %v308 = vld [vmem:[#allocation8 + $0x110] sm:$0xff]
    %v309 = vld [vmem:[#allocation8 + $0x118] sm:$0xff]
    %v310 = vld [vmem:[#allocation8 + $0x120] sm:$0xff]
    %v311 = vld [vmem:[#allocation8 + $0x128] sm:$0xff]
    %v312 = vld [vmem:[#allocation8 + $0x130] sm:$0xff]
    %v313 = vld [vmem:[#allocation8 + $0x138] sm:$0xff]
    %v314 = vld [vmem:[#allocation8 + $0x140] sm:$0xff]
    %v315 = vld [vmem:[#allocation8 + $0x148] sm:$0xff]
    %v316 = vld [vmem:[#allocation8 + $0x150] sm:$0xff]
    %v317 = vld [vmem:[#allocation8 + $0x158] sm:$0xff]
    %v318 = vld [vmem:[#allocation8 + $0x160] sm:$0xff]
    %v319 = vld [vmem:[#allocation8 + $0x168] sm:$0xff]
    %v320 = vld [vmem:[#allocation8 + $0x170] sm:$0xff]
    %v321 = vld [vmem:[#allocation8 + $0x178] sm:$0xff]
    %v322 = vld [vmem:[%s5] sm:$0x7]
    %v323 = vld [vmem:[%s1] sm:$0x1]
    %v324 = vld [vmem:[#allocation2] ss:$8 sm:$0x7]
    %v326 = vlaneseq
    %v327 = vshrl.u32 %v326, 7
    %v328 = vsub.s32 0, %v327
    %v329 = vrot.slane %v322, %v328
    %v330 = vlaneseq
    %v331 = vshrl.u32 %v330, 7
    %v332 = vsub.s32 1, %v331
    %v333 = vrot.slane %v322, %v332
    %v334 = vlaneseq
    %v335 = vshrl.u32 %v334, 7
    %v336 = vsub.s32 2, %v335
    %v337 = vrot.slane %v322, %v336
    %341 = vmatprep.subr.mxu0 %v275
    %342 = vmatpush1.msra.mxu0 %v274
    %343 = vmatprep.subr.mxu0 %v278
    %344 = vmatpush1.msra.mxu0 %v277
    %345 = vmatprep.subr.mxu0 %v281
    %346 = vmatpush1.msra.mxu0 %v280
    %347 = vmatprep.subr.mxu0 %v284
    %348 = vmatpush1.msra.mxu0 %v283
    %349 = vmatprep.subr.mxu0 %v287
    %350 = vmatpush1.msra.mxu0 %v286
    %351 = vmatprep.subr.mxu0 %v290
    %352 = vmatpush1.msra.mxu0 %v289
    %353 = vmatprep.subr.mxu0 %v293
    %354 = vmatpush1.msra.mxu0 %v292
    %355 = vmatprep.subr.mxu0 %v296
    %356 = vmatpush1.msra.mxu0 %v295
    %357 = vmatprep.subr.mxu0 %v299
    %358 = vmatpush1.msra.mxu0 %v298
    %359 = vmatprep.subr.mxu0 %v302
    %360 = vmatpush1.msra.mxu0 %v301
    %361 = vmatprep.subr.mxu0 %v305
    %362 = vmatpush1.msra.mxu0 %v304
    %363 = vmatprep.subr.mxu0 %v308
    %364 = vmatpush1.msra.mxu0 %v307
    %365 = vmatprep.subr.mxu0 %v311
    %366 = vmatpush1.msra.mxu0 %v310
    %367 = vmatprep.subr.mxu0 %v314
    %368 = vmatpush1.msra.mxu0 %v313
    %369 = vmatprep.subr.mxu0 %v317
    %370 = vmatpush1.msra.mxu0 %v316
    %371 = vmatprep.subr.mxu0 %v320
    %372 = vmatpush1.msra.mxu0 %v319
    %373 = vmatprep.subr.mxu0 0.0
    %374 = vmatpush1.msra.mxu0 0.0
    %375 = vmatprep.subr.mxu0 0.0
    %376 = vmatpush1.msra.mxu0 0.0
    %377 = vmatprep.subr.mxu0 0.0
    %378 = vmatpush1.msra.mxu0 0.0
    %379 = vmatprep.subr.mxu0 0.0
    %380 = vmatpush1.msra.mxu0 0.0
    %381 = vmatprep.subr.mxu0 0.0
    %382 = vmatpush1.msra.mxu0 0.0
    %383 = vmatprep.subr.mxu0 0.0
    %384 = vmatpush1.msra.mxu0 0.0
    %385 = vmatprep.subr.mxu0 0.0
    %386 = vmatpush1.msra.mxu0 0.0
    %387 = vmatprep.subr.mxu0 0.0
    %388 = vmatpush1.msra.mxu0 0.0
    %389 = vmatprep.subr.mxu0 0.0
    %390 = vmatpush1.msra.mxu0 0.0
    %391 = vmatprep.subr.mxu0 0.0
    %392 = vmatpush1.msra.mxu0 0.0
    %393 = vmatprep.subr.mxu0 0.0
    %394 = vmatpush1.msra.mxu0 0.0
    %395 = vmatprep.subr.mxu0 0.0
    %396 = vmatpush1.msra.mxu0 0.0
    %397 = vmatprep.subr.mxu0 0.0
    %398 = vmatpush1.msra.mxu0 0.0
    %399 = vmatprep.subr.mxu0 0.0
    %400 = vmatpush1.msra.mxu0 0.0
    %401 = vmatprep.subr.mxu0 0.0
    %402 = vmatpush1.msra.mxu0 0.0
    %403 = vmatprep.subr.mxu0 0.0
    %404 = vmatpush1.msra.mxu0 0.0
    %405 = vmatprep.mubr.f32.mxu0 0.0
    %406 = vmatmul.mubr.f32.gmra.mrb[0].mxu0 %v323
    %v407 = vpop.f32.mrb[0].mxu0
    %v408 = vadd.f32 %v329, %v407
    %v409 = vpop.f32.mrb[0].mxu0
    %v410 = vadd.f32 %v333, %v409
    %411 = vdwg.mxu0
    %412 = vmatprep.subr.mxu0 0.0
    %413 = vmatpush1.msra.mxu0 %v276
    %414 = vmatprep.subr.mxu0 0.0
    %415 = vmatpush1.msra.mxu0 %v279
    %416 = vmatprep.subr.mxu0 0.0
    %417 = vmatpush1.msra.mxu0 %v282
    %418 = vmatprep.subr.mxu0 0.0
    %419 = vmatpush1.msra.mxu0 %v285
    %420 = vmatprep.subr.mxu0 0.0
    %421 = vmatpush1.msra.mxu0 %v288
    %422 = vmatprep.subr.mxu0 0.0
    %423 = vmatpush1.msra.mxu0 %v291
    %424 = vmatprep.subr.mxu0 0.0
    %425 = vmatpush1.msra.mxu0 %v294
    %426 = vmatprep.subr.mxu0 0.0
    %427 = vmatpush1.msra.mxu0 %v297
    %428 = vmatprep.subr.mxu0 0.0
    %429 = vmatpush1.msra.mxu0 %v300
    %430 = vmatprep.subr.mxu0 0.0
    %431 = vmatpush1.msra.mxu0 %v303
    %432 = vmatprep.subr.mxu0 0.0
    %433 = vmatpush1.msra.mxu0 %v306
    %434 = vmatprep.subr.mxu0 0.0
    %435 = vmatpush1.msra.mxu0 %v309
    %436 = vmatprep.subr.mxu0 0.0
    %437 = vmatpush1.msra.mxu0 %v312
    %438 = vmatprep.subr.mxu0 0.0
    %439 = vmatpush1.msra.mxu0 %v315
    %440 = vmatprep.subr.mxu0 0.0
    %441 = vmatpush1.msra.mxu0 %v318
    %442 = vmatprep.subr.mxu0 0.0
    %443 = vmatpush1.msra.mxu0 %v321
    %444 = vmatprep.subr.mxu0 0.0
    %445 = vmatpush1.msra.mxu0 0.0
    %446 = vmatprep.subr.mxu0 0.0
    %447 = vmatpush1.msra.mxu0 0.0
    %448 = vmatprep.subr.mxu0 0.0
    %449 = vmatpush1.msra.mxu0 0.0
    %450 = vmatprep.subr.mxu0 0.0
    %451 = vmatpush1.msra.mxu0 0.0
    %452 = vmatprep.subr.mxu0 0.0
    %453 = vmatpush1.msra.mxu0 0.0
    %454 = vmatprep.subr.mxu0 0.0
    %455 = vmatpush1.msra.mxu0 0.0
    %456 = vmatprep.subr.mxu0 0.0
    %457 = vmatpush1.msra.mxu0 0.0
    %458 = vmatprep.subr.mxu0 0.0
    %459 = vmatpush1.msra.mxu0 0.0
    %460 = vmatprep.subr.mxu0 0.0
    %461 = vmatpush1.msra.mxu0 0.0
    %462 = vmatprep.subr.mxu0 0.0
    %463 = vmatpush1.msra.mxu0 0.0
    %464 = vmatprep.subr.mxu0 0.0
    %465 = vmatpush1.msra.mxu0 0.0
    %466 = vmatprep.subr.mxu0 0.0
    %467 = vmatpush1.msra.mxu0 0.0
    %468 = vmatprep.subr.mxu0 0.0
    %469 = vmatpush1.msra.mxu0 0.0
    %470 = vmatprep.subr.mxu0 0.0
    %471 = vmatpush1.msra.mxu0 0.0
    %472 = vmatprep.subr.mxu0 0.0
    %473 = vmatpush1.msra.mxu0 0.0
    %474 = vmatprep.subr.mxu0 0.0
    %475 = vmatpush1.msra.mxu0 0.0
    %476 = vmatprep.mubr.f32.mxu0 0.0
    %477 = vmatmul.mubr.f32.gmra.mrb[0].mxu0 %v323
    %v478 = vpop.f32.mrb[0].mxu0
    %v479 = vadd.f32 %v337, %v478
    %v480 = vpop.f32.mrb[0].mxu0
    %481 = vdwg.mxu0
    %v482 = vadd.f32 %v324, %v408
    %v483 = vxor.u32 %v482, 2147483648
    %v484 = vmul.f32 %v483, 1.442695
    %v485 = vpow.pop %v484
    %v486 = vadd.f32 %v485, 1.0
    %v487 = vrcp.pop %v486
    %v488 = vmul.f32 1.0, %v487
    %v490 = vrot.slane %v324, 1
    %v492 = vadd.f32 %v490, %v410
    %v493 = vxor.u32 %v492, 2147483648
    %v494 = vmul.f32 %v493, 1.442695
    %v495 = vpow.pop %v494
    %v496 = vadd.f32 %v495, 1.0
    %v497 = vrcp.pop %v496
    %v498 = vmul.f32 1.0, %v497
    %v499 = vmul.f32 %v488, %v479
    %v500 = vrot.slane %v324, 2
    %v502 = vadd.f32 %v500, %v499
    %v503 = vtanh.pop %v502
    %v504 = vsub.f32 1.0, %v498
    %v505 = vmul.f32 %v504, %v503
    %v506 = vmul.f32 %v498, %v323
    %v507 = vadd.f32 %v505, %v506
    %508 = vst [vmem:[#allocation9] sm:$0x1] %v507
    // Predicated region
    $region38: #{tpu_custom_call.1} parent=1 // pred_check
      _
    $region39: #{tpu_custom_call.1} parent=1 // pred_check_branch
      %510 = sbr.rel (0) target = $region41
    $region40: #{tpu_custom_call.1} parent=1 // pred_region
      %s512 = ssub.s32 128, 128
      %513 = vsyncadd [#allocation5], %s512
      %s515 = sshll.u32 [#allocation9], 4
      %s516 = int_to_ptr.vmem [resolvable:$true] %s515
      %518 = dma.vmem_to_hbm [thread:$0]  %s516, 128, %s6, [#allocation5]
    $region41: #{tpu_custom_call.1} parent=1 // pred_fallthru
      _
    // Predicated region
    $region42: #{tpu_custom_call.1} parent=1 // pred_check
      _
    $region43: #{tpu_custom_call.1} parent=1 // pred_check_branch
      %520 = sbr.rel (0) target = $region45
    $region44: #{tpu_custom_call.1} parent=1 // pred_region
      %521 = dma.done [#allocation5], 128
    $region45: #{tpu_custom_call.1} parent=1 // pred_fallthru
      _
    %522 = vsyncpa [#allocation4], 1
    %523 = vsyncpa [#allocation7], 1
    %524 = vsyncpa [#allocation5], 1

</llo_original>
